<compile_context>
chip_gen: v6e
topology: v6e:2x2x1
jax: 0.10.0
libtpu: 0.0.40
codegen_flags: <defaults>
</compile_context>

<pallas_src>
import jax
import jax.numpy as jnp
from jax.experimental import pallas as pl
from jax.experimental.pallas import tpu as pltpu

LANES = 128


def _round_up(x, m):
    return ((x + m - 1) // m) * m


def _sublane_multiple(dtype):
    bits = jnp.dtype(dtype).itemsize * 8
    if bits >= 32:
        return 8
    if bits == 16:
        return 16
    return 32


def _chip_defaults():
    """(n_split, target_block_rows, vmem_limit_bytes) for the local chip."""
    try:
        kind = jax.devices()[0].device_kind.lower()
    except Exception:
        kind = ""
    if "v7" in kind or "7x" in kind:
        # 2 TensorCores, 3.2 TB/s HBM, 64 MiB VMEM: 4 MiB f32 input blocks.
        return 2, 8192, 48 * 1024 * 1024
    if "v6" in kind or "trillium" in kind:
        return 1, 4096, None   # 2 MiB blocks fit the 32 MiB scoped default
    # v5e and anything unknown: 1 MiB blocks fit the 16 MiB scoped default.
    return 1, 2048, None


def _dice_partial_kernel(valid_ref, l_ref, t_ref, out_ref, inter_acc, union_acc):
    """Accumulate (8,128) partial tiles of probs*tgt and probs+tgt per split."""
    s = pl.program_id(0)
    i = pl.program_id(1)
    block_rows = l_ref.shape[0]
    block_elems = block_rows * LANES

    @pl.when(i == 0)
    def _():
        inter_acc[...] = jnp.zeros_like(inter_acc)
        union_acc[...] = jnp.zeros_like(union_acc)

    x = l_ref[...].astype(jnp.float32)
    # Single-transcendental sigmoid: sigmoid(x) == 0.5*tanh(0.5*x) + 0.5.
    probs = 0.5 * jnp.tanh(0.5 * x) + 0.5
    tgt = t_ref[...].astype(jnp.float32)

    # First flat element index covered by this grid step.
    # TODO(synk): int32 flat indices cap the kernel at < 2**31 elements.
    elem_start = (s * pl.num_programs(1) + i) * block_elems
    valid = valid_ref[0]

    def accumulate(p, t):
        # Pure VALU vreg-add chain: fold block_rows//8 (8,128) tiles.
        inter_acc[...] += (p * t).reshape(-1, 8, LANES).sum(axis=0)
        union_acc[...] += (p + t).reshape(-1, 8, LANES).sum(axis=0)

    is_full = elem_start + block_elems <= valid

    @pl.when(is_full)
    def _():
        accumulate(probs, tgt)

    @pl.when(jnp.logical_not(is_full))
    def _():
        # Only the ragged tail block(s) pay for mask construction.
        ridx = jax.lax.broadcasted_iota(jnp.int32, (block_rows, LANES), 0)
        lidx = jax.lax.broadcasted_iota(jnp.int32, (block_rows, LANES), 1)
        mask = (elem_start + ridx * LANES + lidx) < valid
        accumulate(jnp.where(mask, probs, 0.0), jnp.where(mask, tgt, 0.0))

    @pl.when(i == pl.num_programs(1) - 1)
    def _():
        out_ref[0, 0] = inter_acc[...]
        out_ref[0, 1] = union_acc[...]


def dice_loss(logits, targets, smooth=1e-6):
    """Pallas implementation of DiceLoss.forward (returns a scalar)."""
    total = int(logits.size)
    assert int(targets.size) == total

    mult = max(_sublane_multiple(logits.dtype), _sublane_multiple(targets.dtype))

    lf = logits.reshape(-1)
    tf = targets.reshape(-1)

    # Lane-dense view. Pad only to a multiple of 128 lanes and at least one
    # minimal sublane tile -- a few KiB at most, never a full-array copy.
    # (Pad contents are irrelevant: the kernel masks by valid element count.)
    rows = max(pl.cdiv(total, LANES), mult)
    pad = rows * LANES - total
    if pad:
        lf = jnp.pad(lf, (0, pad))
        tf = jnp.pad(tf, (0, pad))
    lf = lf.reshape(rows, LANES)
    tf = tf.reshape(rows, LANES)

    n_split, target_rows, vmem_limit = _chip_defaults()
    if rows < 2 * target_rows:
        n_split = 1  # too little data to bother splitting across TensorCores

    block_rows = min(target_rows, _round_up(pl.cdiv(rows, n_split), mult))
    if block_rows > rows:
        block_rows = (rows // mult) * mult  # keep the block within the array
    n_blocks = pl.cdiv(rows, block_rows)
    blocks_per_split = pl.cdiv(n_blocks, n_split)

    valid = jnp.array([total], dtype=jnp.int32)

    # Clamp the block index so trailing (empty) grid steps of the last split
    # just re-read the final valid block; their contribution is masked to 0.
    def in_map(s, i, valid_ref):
        return (jnp.minimum(s * blocks_per_split + i, n_blocks - 1), 0)

    def out_map(s, i, valid_ref):
        return (s, 0, 0, 0)

    partials = pl.pallas_call(
        _dice_partial_kernel,
        out_shape=jax.ShapeDtypeStruct((n_split, 2, 8, LANES), jnp.float32),
        grid_spec=pltpu.PrefetchScalarGridSpec(
            num_scalar_prefetch=1,
            grid=(n_split, blocks_per_split),
            in_specs=[
                pl.BlockSpec((block_rows, LANES), in_map),
                pl.BlockSpec((block_rows, LANES), in_map),
            ],
            out_specs=pl.BlockSpec((1, 2, 8, LANES), out_map),
            scratch_shapes=[
                pltpu.VMEM((8, LANES), jnp.float32),
                pltpu.VMEM((8, LANES), jnp.float32),
            ],
        ),
        compiler_params=pltpu.CompilerParams(
            dimension_semantics=("parallel", "arbitrary"),
            vmem_limit_bytes=vmem_limit),
    )(valid, lf, tf)

    # Tiny scalar epilogue (combines per-split (8,128) partial tiles).
    inter = jnp.sum(partials[:, 0])
    union = jnp.sum(partials[:, 1])
    dice = (2.0 * inter + float(smooth)) / (union + float(smooth))
    return 1.0 - dice


def _reference(logits, targets, smooth=1e-6):
    probs = jax.nn.sigmoid(logits.astype(jnp.float32))
    tgt = targets.astype(jnp.float32)
    inter = jnp.sum(probs * tgt)
    union = jnp.sum(probs) + jnp.sum(tgt)
    return 1.0 - (2.0 * inter + smooth) / (union + smooth)


if __name__ == "__main__":
    key = jax.random.PRNGKey(0)
    k1, k2, k3, k4 = jax.random.split(key, 4)

    # 1) Aligned f32 case: (B, C, H, W) segmentation-style logits/targets.
    logits = jax.random.normal(k1, (2, 4, 16, 16), dtype=jnp.float32)
    targets = (jax.random.uniform(k2, (2, 4, 16, 16)) > 0.5).astype(jnp.float32)
    loss = jax.block_until_ready(dice_loss(logits, targets))
    ref = _reference(logits, targets)
    assert jnp.allclose(loss, ref, atol=1e-5, rtol=1e-5), (loss, ref)

    # 2) Ragged size (not a multiple of 128): exercises the in-kernel mask.
    logits_r = jax.random.normal(k3, (2, 3, 7, 11), dtype=jnp.float32)
    targets_r = (jax.random.uniform(k4, (2, 3, 7, 11)) > 0.5).astype(jnp.float32)
    loss_r = jax.block_until_ready(dice_loss(logits_r, targets_r))
    ref_r = _reference(logits_r, targets_r)
    assert jnp.allclose(loss_r, ref_r, atol=1e-5, rtol=1e-5), (loss_r, ref_r)

    # 3) Native bf16 logits streamed without a wrapper cast (in-VMEM upcast).
    logits_b = logits.astype(jnp.bfloat16)
    loss_b = jax.block_until_ready(dice_loss(logits_b, targets))
    ref_b = _reference(logits_b, targets)
    assert jnp.allclose(loss_b, ref_b, atol=1e-5, rtol=1e-5), (loss_b, ref_b)

    print("KERNEL_OK")
</pallas_src>

<mosaic_0001>
module attributes {stable_mosaic.version = 11 : i64} {
  func.func @_dice_partial_kernel(%arg0: i32, %arg1: i32, %arg2: memref<1xi32, #tpu.memory_space<smem>>, %arg3: memref<16x128xf32, #tpu.memory_space<vmem>>, %arg4: memref<16x128xf32, #tpu.memory_space<vmem>>, %arg5: memref<1x2x8x128xf32, #tpu.memory_space<vmem>>, %arg6: memref<8x128xf32, #tpu.memory_space<vmem>>, %arg7: memref<8x128xf32, #tpu.memory_space<vmem>>) attributes {dimension_semantics = [#tpu.dimension_semantics<parallel>, #tpu.dimension_semantics<arbitrary>], iteration_bounds = array<i64: 1, 1>, scalar_prefetch = 1 : i64, scratch_operands = 2 : i64, tpu.core_type = #tpu.core_type<tc>, window_params = [{transform_indices = @transform_0, window_bounds = array<i64: 16, 128>}, {transform_indices = @transform_1, window_bounds = array<i64: 16, 128>}, {transform_indices = @transform_2, window_bounds = array<i64: 1, 2, 8, 128>}]} {
    %c0_i32 = arith.constant 0 : i32
    %0 = arith.cmpi eq, %arg1, %c0_i32 : i32
    %1 = arith.extui %0 : i1 to i32
    %c0_i32_0 = arith.constant 0 : i32
    %2 = arith.cmpi ne, %1, %c0_i32_0 : i32
    scf.if %2 {
      %cst_12 = arith.constant 0.000000e+00 : f32
      %26 = vector.broadcast %cst_12 : f32 to vector<8x128xf32>
      %c0_13 = arith.constant 0 : index
      %c0_14 = arith.constant 0 : index
      %27 = vector.load %arg6[%c0_13, %c0_14] : memref<8x128xf32, #tpu.memory_space<vmem>>, vector<8x128xf32>
      tpu.vector_store %arg6[%c0_13, %c0_14], %26 {strides = array<i32>} : memref<8x128xf32, #tpu.memory_space<vmem>>, vector<8x128xf32>,
      %cst_15 = arith.constant 0.000000e+00 : f32
      %28 = vector.broadcast %cst_15 : f32 to vector<8x128xf32>
      %c0_16 = arith.constant 0 : index
      %c0_17 = arith.constant 0 : index
      %29 = vector.load %arg7[%c0_16, %c0_17] : memref<8x128xf32, #tpu.memory_space<vmem>>, vector<8x128xf32>
      tpu.vector_store %arg7[%c0_16, %c0_17], %28 {strides = array<i32>} : memref<8x128xf32, #tpu.memory_space<vmem>>, vector<8x128xf32>,
    } else {
    }
    %c0 = arith.constant 0 : index
    %c0_1 = arith.constant 0 : index
    %3 = vector.load %arg3[%c0, %c0_1] : memref<16x128xf32, #tpu.memory_space<vmem>>, vector<16x128xf32>
    %cst = arith.constant 5.000000e-01 : f32
    %4 = vector.broadcast %cst : f32 to vector<16x128xf32>
    %5 = arith.mulf %4, %3 : vector<16x128xf32>
    %6 = math.tanh %5 : vector<16x128xf32>
    %cst_2 = arith.constant 5.000000e-01 : f32
    %7 = vector.broadcast %cst_2 : f32 to vector<16x128xf32>
    %8 = arith.mulf %7, %6 : vector<16x128xf32>
    %cst_3 = arith.constant 5.000000e-01 : f32
    %9 = vector.broadcast %cst_3 : f32 to vector<16x128xf32>
    %10 = arith.addf %8, %9 : vector<16x128xf32>
    %c0_4 = arith.constant 0 : index
    %c0_5 = arith.constant 0 : index
    %11 = vector.load %arg4[%c0_4, %c0_5] : memref<16x128xf32, #tpu.memory_space<vmem>>, vector<16x128xf32>
    %c1_i32 = arith.constant 1 : i32
    %12 = arith.muli %arg0, %c1_i32 : i32
    %13 = arith.addi %12, %arg1 : i32
    %c2048_i32 = arith.constant 2048 : i32
    %14 = arith.muli %13, %c2048_i32 : i32
    %c0_6 = arith.constant 0 : index
    %15 = memref.load %arg2[%c0_6] : memref<1xi32, #tpu.memory_space<smem>>
    %c2048_i32_7 = arith.constant 2048 : i32
    %16 = arith.addi %14, %c2048_i32_7 : i32
    %17 = arith.cmpi sle, %16, %15 : i32
    %18 = arith.extui %17 : i1 to i32
    %c0_i32_8 = arith.constant 0 : i32
    %19 = arith.cmpi ne, %18, %c0_i32_8 : i32
    scf.if %19 {
      %c0_12 = arith.constant 0 : index
      %c0_13 = arith.constant 0 : index
      %26 = vector.load %arg6[%c0_12, %c0_13] : memref<8x128xf32, #tpu.memory_space<vmem>>, vector<8x128xf32>
      %27 = arith.mulf %10, %11 : vector<16x128xf32>
      %28 = vector.shape_cast %27 : vector<16x128xf32> to vector<2x8x128xf32>
      %cst_14 = arith.constant dense<0.000000e+00> : vector<8x128xf32>
      %29 = vector.multi_reduction <add>, %28, %cst_14 [0] : vector<2x8x128xf32> to vector<8x128xf32>
      %30 = arith.addf %26, %29 : vector<8x128xf32>
      %c0_15 = arith.constant 0 : index
      %c0_16 = arith.constant 0 : index
      %31 = vector.load %arg6[%c0_15, %c0_16] : memref<8x128xf32, #tpu.memory_space<vmem>>, vector<8x128xf32>
      tpu.vector_store %arg6[%c0_15, %c0_16], %30 {strides = array<i32>} : memref<8x128xf32, #tpu.memory_space<vmem>>, vector<8x128xf32>,
      %c0_17 = arith.constant 0 : index
      %c0_18 = arith.constant 0 : index
      %32 = vector.load %arg7[%c0_17, %c0_18] : memref<8x128xf32, #tpu.memory_space<vmem>>, vector<8x128xf32>
      %33 = arith.addf %10, %11 : vector<16x128xf32>
      %34 = vector.shape_cast %33 : vector<16x128xf32> to vector<2x8x128xf32>
      %cst_19 = arith.constant dense<0.000000e+00> : vector<8x128xf32>
      %35 = vector.multi_reduction <add>, %34, %cst_19 [0] : vector<2x8x128xf32> to vector<8x128xf32>
      %36 = arith.addf %32, %35 : vector<8x128xf32>
      %c0_20 = arith.constant 0 : index
      %c0_21 = arith.constant 0 : index
      %37 = vector.load %arg7[%c0_20, %c0_21] : memref<8x128xf32, #tpu.memory_space<vmem>>, vector<8x128xf32>
      tpu.vector_store %arg7[%c0_20, %c0_21], %36 {strides = array<i32>} : memref<8x128xf32, #tpu.memory_space<vmem>>, vector<8x128xf32>,
    } else {
    }
    %true = arith.constant true
    %20 = arith.xori %17, %true : i1
    %21 = arith.extui %20 : i1 to i32
    %c0_i32_9 = arith.constant 0 : i32
    %22 = arith.cmpi ne, %21, %c0_i32_9 : i32
    scf.if %22 {
      %26 = tpu.iota {dimensions = array<i32: 0>} : vector<16x128xi32>
      %27 = tpu.iota {dimensions = array<i32: 1>} : vector<16x128xi32>
      %c128_i32 = arith.constant 128 : i32
      %28 = vector.broadcast %c128_i32 : i32 to vector<16x128xi32>
      %29 = arith.muli %26, %28 : vector<16x128xi32>
      %30 = vector.broadcast %14 : i32 to vector<16x128xi32>
      %31 = arith.addi %30, %29 : vector<16x128xi32>
      %32 = arith.addi %31, %27 : vector<16x128xi32>
      %33 = vector.broadcast %15 : i32 to vector<16x128xi32>
      %34 = arith.cmpi slt, %32, %33 : vector<16x128xi32>
      %cst_12 = arith.constant 0.000000e+00 : f32
      %35 = vector.broadcast %cst_12 : f32 to vector<16x128xf32>
      %36 = arith.select %34, %10, %35 : vector<16x128xi1>, vector<16x128xf32>
      %cst_13 = arith.constant 0.000000e+00 : f32
      %37 = vector.broadcast %cst_13 : f32 to vector<16x128xf32>
      %38 = arith.select %34, %11, %37 : vector<16x128xi1>, vector<16x128xf32>
      %c0_14 = arith.constant 0 : index
      %c0_15 = arith.constant 0 : index
      %39 = vector.load %arg6[%c0_14, %c0_15] : memref<8x128xf32, #tpu.memory_space<vmem>>, vector<8x128xf32>
      %40 = arith.mulf %36, %38 : vector<16x128xf32>
      %41 = vector.shape_cast %40 : vector<16x128xf32> to vector<2x8x128xf32>
      %cst_16 = arith.constant dense<0.000000e+00> : vector<8x128xf32>
      %42 = vector.multi_reduction <add>, %41, %cst_16 [0] : vector<2x8x128xf32> to vector<8x128xf32>
      %43 = arith.addf %39, %42 : vector<8x128xf32>
      %c0_17 = arith.constant 0 : index
      %c0_18 = arith.constant 0 : index
      %44 = vector.load %arg6[%c0_17, %c0_18] : memref<8x128xf32, #tpu.memory_space<vmem>>, vector<8x128xf32>
      tpu.vector_store %arg6[%c0_17, %c0_18], %43 {strides = array<i32>} : memref<8x128xf32, #tpu.memory_space<vmem>>, vector<8x128xf32>,
      %c0_19 = arith.constant 0 : index
      %c0_20 = arith.constant 0 : index
      %45 = vector.load %arg7[%c0_19, %c0_20] : memref<8x128xf32, #tpu.memory_space<vmem>>, vector<8x128xf32>
      %46 = arith.addf %36, %38 : vector<16x128xf32>
      %47 = vector.shape_cast %46 : vector<16x128xf32> to vector<2x8x128xf32>
      %cst_21 = arith.constant dense<0.000000e+00> : vector<8x128xf32>
      %48 = vector.multi_reduction <add>, %47, %cst_21 [0] : vector<2x8x128xf32> to vector<8x128xf32>
      %49 = arith.addf %45, %48 : vector<8x128xf32>
      %c0_22 = arith.constant 0 : index
      %c0_23 = arith.constant 0 : index
      %50 = vector.load %arg7[%c0_22, %c0_23] : memref<8x128xf32, #tpu.memory_space<vmem>>, vector<8x128xf32>
      tpu.vector_store %arg7[%c0_22, %c0_23], %49 {strides = array<i32>} : memref<8x128xf32, #tpu.memory_space<vmem>>, vector<8x128xf32>,
    } else {
    }
    %c0_i32_10 = arith.constant 0 : i32
    %23 = arith.cmpi eq, %arg1, %c0_i32_10 : i32
    %24 = arith.extui %23 : i1 to i32
    %c0_i32_11 = arith.constant 0 : i32
    %25 = arith.cmpi ne, %24, %c0_i32_11 : i32
    scf.if %25 {
      %c0_12 = arith.constant 0 : index
      %c0_13 = arith.constant 0 : index
      %26 = vector.load %arg6[%c0_12, %c0_13] : memref<8x128xf32, #tpu.memory_space<vmem>>, vector<8x128xf32>
      %c0_14 = arith.constant 0 : index
      %c0_15 = arith.constant 0 : index
      %c0_16 = arith.constant 0 : index
      %c0_17 = arith.constant 0 : index
      %27 = vector.load %arg5[%c0_14, %c0_15, %c0_16, %c0_17] : memref<1x2x8x128xf32, #tpu.memory_space<vmem>>, vector<1x1x8x128xf32>
      %28 = vector.shape_cast %27 : vector<1x1x8x128xf32> to vector<8x128xf32>
      %29 = vector.shape_cast %26 : vector<8x128xf32> to vector<1x1x8x128xf32>
      tpu.vector_store %arg5[%c0_14, %c0_15, %c0_16, %c0_17], %29 {strides = array<i32>} : memref<1x2x8x128xf32, #tpu.memory_space<vmem>>, vector<1x1x8x128xf32>,
      %c0_18 = arith.constant 0 : index
      %c0_19 = arith.constant 0 : index
      %30 = vector.load %arg7[%c0_18, %c0_19] : memref<8x128xf32, #tpu.memory_space<vmem>>, vector<8x128xf32>
      %c0_20 = arith.constant 0 : index
      %c1 = arith.constant 1 : index
      %c0_21 = arith.constant 0 : index
      %c0_22 = arith.constant 0 : index
      %31 = vector.load %arg5[%c0_20, %c1, %c0_21, %c0_22] : memref<1x2x8x128xf32, #tpu.memory_space<vmem>>, vector<1x1x8x128xf32>
      %32 = vector.shape_cast %31 : vector<1x1x8x128xf32> to vector<8x128xf32>
      %33 = vector.shape_cast %30 : vector<8x128xf32> to vector<1x1x8x128xf32>
      tpu.vector_store %arg5[%c0_20, %c1, %c0_21, %c0_22], %33 {strides = array<i32>} : memref<1x2x8x128xf32, #tpu.memory_space<vmem>>, vector<1x1x8x128xf32>,
    } else {
    }
    return
  }
  func.func @transform_0(%arg0: i32, %arg1: i32, %arg2: memref<1xi32, #tpu.memory_space<smem>>) -> (i32, i32) {
    %c1_i32 = arith.constant 1 : i32
    %0 = arith.muli %arg0, %c1_i32 : i32
    %1 = arith.addi %0, %arg1 : i32
    %c0_i32 = arith.constant 0 : i32
    %2 = arith.minsi %1, %c0_i32 : i32
    %c0_i32_0 = arith.constant 0 : i32
    %c0_i32_1 = arith.constant 0 : i32
    return %2, %c0_i32_0 : i32, i32
  }
  func.func @transform_1(%arg0: i32, %arg1: i32, %arg2: memref<1xi32, #tpu.memory_space<smem>>) -> (i32, i32) {
    %c1_i32 = arith.constant 1 : i32
    %0 = arith.muli %arg0, %c1_i32 : i32
    %1 = arith.addi %0, %arg1 : i32
    %c0_i32 = arith.constant 0 : i32
    %2 = arith.minsi %1, %c0_i32 : i32
    %c0_i32_0 = arith.constant 0 : i32
    %c0_i32_1 = arith.constant 0 : i32
    return %2, %c0_i32_0 : i32, i32
  }
  func.func @transform_2(%arg0: i32, %arg1: i32, %arg2: memref<1xi32, #tpu.memory_space<smem>>) -> (i32, i32, i32, i32) {
    %c0_i32 = arith.constant 0 : i32
    %c0_i32_0 = arith.constant 0 : i32
    %c0_i32_1 = arith.constant 0 : i32
    %c0_i32_2 = arith.constant 0 : i32
    return %arg0, %c0_i32, %c0_i32_0, %c0_i32_1 : i32, i32, i32, i32
  }
}

</mosaic_0001>

<llo_original>
// kernel: tpu_custom_call.1
$region0: #{tpu_custom_call.1}
  #allocation0 [shape = 'u32[]', space=smem, size = 0x4, offset = 0x4, fixed_abs, tag = 'smem constant byte address 0x4 - core index']
  #allocation1 [shape = 'u32[144,128]{1,0:T(1,128)}', space=vmem, size = 0x12000, scoped, tag = 'internal scratch']
  #allocation2 [shape = 'f32[8,128]{1,0:T(8,128)}', space=vmem, size = 0x1000, scoped, tag = 'scratch operand']
  #allocation3 [shape = 'f32[8,128]{1,0:T(8,128)}', space=vmem, size = 0x1000, scoped, tag = 'scratch operand']
  #allocation4 [shape = 's32[1]{0}', space=sflag, size = 0x4, scoped, tag = 'scoped memory for tpu_custom_call.1']
  #allocation5 [shape = 's32[1]{0:T(128)S(6)}', space=smem, size = 0x200, scoped, tag = 'prefetched SMEM operand 0']
  %s0 = inlined_call_operand.<no memory space> [shape: s32[1], index: 0, kind: input, shape index: {}]
  %s1 = inlined_call_operand.hbm [shape: f32[16,128], index: 1, kind: input, shape index: {}]
  %s2 = inlined_call_operand.hbm [shape: f32[16,128], index: 2, kind: input, shape index: {}]
  %s3 = inlined_call_operand.hbm [shape: f32[1,2,8,128], index: 3, kind: output, shape index: {}]
  %s4 = sld [smem:[#allocation0]]
  $region42: #{tpu_custom_call.1} parent=0
    _
  %s6 = ssub.s32 1, %s4
  %s7 = scalar_select 0, %s6, %s4
  %8 = sst [smem:[#allocation5]] %s0
  $region1: #{tpu_custom_call.1} parent=0
    #allocation6 [shape = 'u8[8192]{0}', space=vmem, size = 0x2000, scoped, tag = 'input window, operand 1, single buffered']
    #allocation7 [shape = 's32[1]{0}', space=sflag, size = 0x4, scoped, tag = 'scoped memory for tpu_custom_call.1']
    #allocation8 [shape = 's32[1]{0}', space=sflag, size = 0x4, scoped, tag = 'scoped memory for tpu_custom_call.1']
    #allocation9 [shape = 'u8[8192]{0}', space=vmem, size = 0x2000, scoped, tag = 'input window, operand 2, single buffered']
    #allocation10 [shape = 's32[1]{0}', space=sflag, size = 0x4, scoped, tag = 'scoped memory for tpu_custom_call.1']
    #allocation11 [shape = 'u8[8192]{0}', space=vmem, size = 0x2000, scoped, tag = 'output window, operand 0, single buffered']
    %9 = vsyncpa [#allocation7], 0
    %10 = vsyncpa [#allocation10], 0
    %11 = vsyncpa [#allocation8], 0
    // Predicated region
    $region2: #{tpu_custom_call.1} parent=1 // pred_check
      _
    $region3: #{tpu_custom_call.1} parent=1 // pred_check_branch
      %13 = sbr.rel (0) target = $region5
    $region4: #{tpu_custom_call.1} parent=1 // pred_region
      %s14 = sadd.s32 0, 0
      %p15 = scmp.lt.s32.totalorder %s14, 0
      %s16 = scalar_select %p15, %s14, 0
      %s17 = smul.u32 2, %s16
      %s19 = ssub.s32 256, 256
      %20 = vsyncadd [#allocation7], %s19
      %s21 = smul.addr %s17, 128
      %s22 = scalar_lea.hbm %s1, %s21
      %s23 = sshll.u32 [#allocation6], 4
      %s24 = int_to_ptr.vmem [resolvable:$true] %s23
      %29 = dma.hbm_to_vmem [thread:$0]  %s22, 256, %s24, [#allocation7], 128, 128, 8
    $region5: #{tpu_custom_call.1} parent=1 // pred_fallthru
      _
    // Predicated region
    $region6: #{tpu_custom_call.1} parent=1 // pred_check
      _
    $region7: #{tpu_custom_call.1} parent=1 // pred_check_branch
      %31 = sbr.rel (0) target = $region9
    $region8: #{tpu_custom_call.1} parent=1 // pred_region
      %s32 = sadd.s32 0, 0
      %p33 = scmp.lt.s32.totalorder %s32, 0
      %s34 = scalar_select %p33, %s32, 0
      %s35 = smul.u32 2, %s34
      %s37 = ssub.s32 256, 256
      %38 = vsyncadd [#allocation10], %s37
      %s39 = smul.addr %s35, 128
      %s40 = scalar_lea.hbm %s2, %s39
      %s41 = sshll.u32 [#allocation9], 4
      %s42 = int_to_ptr.vmem [resolvable:$true] %s41
      %47 = dma.hbm_to_vmem [thread:$0]  %s40, 256, %s42, [#allocation10], 128, 128, 8
    $region9: #{tpu_custom_call.1} parent=1 // pred_fallthru
      _
    // Predicated region
    $region10: #{tpu_custom_call.1} parent=1 // pred_check
      _
    $region11: #{tpu_custom_call.1} parent=1 // pred_check_branch
      %49 = sbr.rel (0) target = $region13
    $region12: #{tpu_custom_call.1} parent=1 // pred_region
      %50 = dma.done [#allocation7], 256
    $region13: #{tpu_custom_call.1} parent=1 // pred_fallthru
      _
    // Predicated region
    $region14: #{tpu_custom_call.1} parent=1 // pred_check
      _
    $region15: #{tpu_custom_call.1} parent=1 // pred_check_branch
      %52 = sbr.rel (0) target = $region17
    $region16: #{tpu_custom_call.1} parent=1 // pred_region
      %53 = dma.done [#allocation10], 256
    $region17: #{tpu_custom_call.1} parent=1 // pred_fallthru
      _
    %s54 = sadd.s32 0, 0
    %p55 = scmp.lt.s32.totalorder %s54, 0
    %s56 = scalar_select %p55, %s54, 0
    %s57 = smul.u32 2, %s56
    %s58 = sadd.s32 0, 0
    %p59 = scmp.lt.s32.totalorder %s58, 0
    %s60 = scalar_select %p59, %s58, 0
    %s61 = smul.u32 2, %s60
    %p62 = scmp.eq.s32.totalorder 0, 0
    // Predicated region
    $region18: #{tpu_custom_call.1} parent=1 // pred_check
      %p63 = pneg %p62
    $region19: #{tpu_custom_call.1} parent=1 // pred_check_branch
      %65 = sbr.rel (%p63) target = $region21
    $region20: #{tpu_custom_call.1} parent=1 // pred_region
      %66 = vst [vmem:[#allocation2] sm:$0xff] 0.0
      %67 = vst [vmem:[#allocation3] sm:$0xff] 0.0
    $region21: #{tpu_custom_call.1} parent=1 // pred_fallthru
      _
    %v68 = vld [vmem:[#allocation6] sm:$0xff]
    %v69 = vld [vmem:[#allocation6 + $0x8] sm:$0xff]
    %v70 = vmul.f32 %v68, 0.5
    %v71 = vmul.f32 %v69, 0.5
    %v72 = vtanh.pop %v70
    %v73 = vtanh.pop %v71
    %v74 = vmul.f32 %v72, 0.5
    %v75 = vmul.f32 %v73, 0.5
    %v76 = vadd.f32 %v74, 0.5
    %v77 = vadd.f32 %v75, 0.5
    %v78 = vld [vmem:[#allocation9] sm:$0xff]
    %v79 = vld [vmem:[#allocation9 + $0x8] sm:$0xff]
    %s80 = sadd.s32 0, 0
    %s81 = smul.u32 %s80, 2048
    %s82 = sld [smem:[#allocation5]]
    %s83 = sadd.s32 %s81, 2048
    %p84 = scmp.le.s32.totalorder %s83, %s82
    // Predicated region
    $region22: #{tpu_custom_call.1} parent=1 // pred_check
      %p85 = pneg %p84
    $region23: #{tpu_custom_call.1} parent=1 // pred_check_branch
      %87 = sbr.rel (%p85) target = $region25
    $region24: #{tpu_custom_call.1} parent=1 // pred_region
      %v88 = vld [vmem:[#allocation2] sm:$0xff]
      %v89 = vmul.f32 %v76, %v78
      %v90 = vmul.f32 %v77, %v79
      %v91 = vadd.f32 %v89, %v90
      %v92 = vadd.f32 %v88, %v91
      %93 = vst [vmem:[#allocation2] sm:$0xff] %v92
      %v94 = vld [vmem:[#allocation3] sm:$0xff]
      %v95 = vadd.f32 %v76, %v78
      %v96 = vadd.f32 %v77, %v79
      %v97 = vadd.f32 %v95, %v96
      %v98 = vadd.f32 %v94, %v97
      %99 = vst [vmem:[#allocation3] sm:$0xff] %v98
    $region25: #{tpu_custom_call.1} parent=1 // pred_fallthru
      _
    %p100 = scmp.gt.s32.totalorder %s83, %s82
    // Predicated region
    $region26: #{tpu_custom_call.1} parent=1 // pred_check
      %p101 = pneg %p100
    $region27: #{tpu_custom_call.1} parent=1 // pred_check_branch
      %103 = sbr.rel (%p101) target = $region29
    $region28: #{tpu_custom_call.1} parent=1 // pred_region
      %v104 = vlaneseq
      %v105 = vshrl.u32 %v104, 7
      %v106 = vadd.s32 %v105, 8
      %v107 = vlaneseq
      %v108 = vand.u32 %v107, 127
      %v109 = vmul.u32 %v105, 128
      %v110 = vmul.u32 %v106, 128
      %v111 = vstv %s81
      %v112 = vadd.s32 %v111, %v109
      %v113 = vadd.s32 %v111, %v110
      %v114 = vadd.s32 %v112, %v108
      %v115 = vadd.s32 %v113, %v108
      %v116 = vstv %s82
      %vm117 = vcmp.lt.s32.totalorder %v114, %v116
      %vm118 = vcmp.lt.s32.totalorder %v115, %v116
      %v119 = vsel %vm117, %v76, 0.0
      %v120 = vsel %vm118, %v77, 0.0
      %v121 = vsel %vm117, %v78, 0.0
      %v122 = vsel %vm118, %v79, 0.0
      %v123 = vld [vmem:[#allocation2] sm:$0xff]
      %v124 = vmul.f32 %v119, %v121
      %v125 = vmul.f32 %v120, %v122
      %v126 = vadd.f32 %v124, %v125
      %v127 = vadd.f32 %v123, %v126
      %128 = vst [vmem:[#allocation2] sm:$0xff] %v127
      %v129 = vld [vmem:[#allocation3] sm:$0xff]
      %v130 = vadd.f32 %v119, %v121
      %v131 = vadd.f32 %v120, %v122
      %v132 = vadd.f32 %v130, %v131
      %v133 = vadd.f32 %v129, %v132
      %134 = vst [vmem:[#allocation3] sm:$0xff] %v133
    $region29: #{tpu_custom_call.1} parent=1 // pred_fallthru
      _
    // Predicated region
    $region30: #{tpu_custom_call.1} parent=1 // pred_check
      %p135 = pneg %p62
    $region31: #{tpu_custom_call.1} parent=1 // pred_check_branch
      %137 = sbr.rel (%p135) target = $region33
    $region32: #{tpu_custom_call.1} parent=1 // pred_region
      %v138 = vld [vmem:[#allocation2] sm:$0xff]
      %139 = vst [vmem:[#allocation11] sm:$0xff] %v138
      %v140 = vld [vmem:[#allocation3] sm:$0xff]
      %s141 = scalar_lea.vmem [#allocation11], 8
      %142 = vst [vmem:[%s141] sm:$0xff] %v140
    $region33: #{tpu_custom_call.1} parent=1 // pred_fallthru
      _
    // Predicated region
    $region34: #{tpu_custom_call.1} parent=1 // pred_check
      _
    $region35: #{tpu_custom_call.1} parent=1 // pred_check_branch
      %144 = sbr.rel (0) target = $region37
    $region36: #{tpu_custom_call.1} parent=1 // pred_region
      %s146 = ssub.s32 256, 256
      %147 = vsyncadd [#allocation8], %s146
      %s148 = sshll.u32 [#allocation11], 4
      %s149 = int_to_ptr.vmem [resolvable:$true] %s148
      %154 = dma.vmem_to_hbm [thread:$0]  %s149, 256, %s3, [#allocation8], 128, 128, 8
    $region37: #{tpu_custom_call.1} parent=1 // pred_fallthru
      _
    // Predicated region
    $region38: #{tpu_custom_call.1} parent=1 // pred_check
      _
    $region39: #{tpu_custom_call.1} parent=1 // pred_check_branch
      %156 = sbr.rel (0) target = $region41
    $region40: #{tpu_custom_call.1} parent=1 // pred_region
      %157 = dma.done [#allocation8], 256
    $region41: #{tpu_custom_call.1} parent=1 // pred_fallthru
      _
    %158 = vsyncpa [#allocation7], 1
    %159 = vsyncpa [#allocation10], 1
    %160 = vsyncpa [#allocation8], 1

</llo_original>
